<compile_context>
chip_gen: v7x
topology: tpu7x:2x2x1
jax: 0.10.0
libtpu: 0.0.40
codegen_flags: <defaults>
</compile_context>

<pallas_src>
import math

import jax
import jax.numpy as jnp
from jax.experimental import pallas as pl
from jax.experimental.pallas import tpu as pltpu


def _round_up(x, m):
    return ((x + m - 1) // m) * m


def _pad2d(a, rows, cols):
    r, c = a.shape
    return jnp.pad(a, ((0, rows - r), (0, cols - c)))


def _fused_mlp_kernel(x_ref, w1_ref, b1_ref, w2_ref, b2_ref, o_ref, acc_ref):
    """One (mlp, row-tile, hidden-chunk) grid step of relu(x@W1+b1)@W2+b2."""
    k = pl.program_id(2)

    @pl.when(k == 0)
    def _():
        acc_ref[...] = jnp.zeros_like(acc_ref)

    x = x_ref[0]                                               # (tile_m, d_in_pad)  bf16
    w1 = w1_ref[0]                                             # (d_in_pad, tile_h)  bf16
    h = jnp.dot(x, w1, preferred_element_type=jnp.float32)     # f32 accumulation
    h = jnp.maximum(h + b1_ref[0], 0.0)                        # bias + ReLU in f32
    # Accumulate this hidden chunk's contribution to the output tile.
    acc_ref[...] += jnp.dot(h.astype(jnp.bfloat16), w2_ref[0],
                            preferred_element_type=jnp.float32)

    @pl.when(k == pl.num_programs(2) - 1)
    def _():
        o_ref[0] = (acc_ref[...] + b2_ref[0]).astype(o_ref.dtype)


def fused_mlp_forward(x, w1s, b1s, w2s, b2s, *, tile_m, tile_h):
    """x: [2, n_pad, d_in_pad] bf16; w1s: [2, d_in_pad, hid_pad] bf16;
    b1s: [2, 1, hid_pad] f32; w2s: [2, hid_pad, d_out_pad] bf16;
    b2s: [2, 1, d_out_pad] f32.  Returns [2, n_pad, d_out_pad] f32."""
    n_mlp, n_pad, d_in_pad = x.shape
    hidden_pad = w1s.shape[2]
    d_out_pad = w2s.shape[2]
    assert n_pad % tile_m == 0 and hidden_pad % tile_h == 0

    grid = (n_mlp, n_pad // tile_m, hidden_pad // tile_h)

    flops = 2 * n_mlp * n_pad * (d_in_pad * hidden_pad + hidden_pad * d_out_pad)
    bytes_accessed = (x.size * x.dtype.itemsize
                      + w1s.size * w1s.dtype.itemsize
                      + w2s.size * w2s.dtype.itemsize
                      + b1s.size * b1s.dtype.itemsize
                      + b2s.size * b2s.dtype.itemsize
                      + n_mlp * n_pad * d_out_pad * 4)

    return pl.pallas_call(
        _fused_mlp_kernel,
        out_shape=jax.ShapeDtypeStruct((n_mlp, n_pad, d_out_pad), jnp.float32),
        grid_spec=pltpu.PrefetchScalarGridSpec(
            num_scalar_prefetch=0,
            grid=grid,
            in_specs=[
                pl.BlockSpec((1, tile_m, d_in_pad), lambda m, i, k: (m, i, 0)),   # x tile
                pl.BlockSpec((1, d_in_pad, tile_h), lambda m, i, k: (m, 0, k)),   # W1 slab
                pl.BlockSpec((1, 1, tile_h),        lambda m, i, k: (m, 0, k)),   # b1 slab
                pl.BlockSpec((1, tile_h, d_out_pad), lambda m, i, k: (m, k, 0)),  # W2 slab
                pl.BlockSpec((1, 1, d_out_pad),     lambda m, i, k: (m, 0, 0)),   # b2
            ],
            out_specs=pl.BlockSpec((1, tile_m, d_out_pad),
                                   lambda m, i, k: (m, i, 0)),
            scratch_shapes=[pltpu.VMEM((tile_m, d_out_pad), jnp.float32)],
        ),
        compiler_params=pltpu.CompilerParams(
            dimension_semantics=("parallel", "parallel", "arbitrary"),
            vmem_limit_bytes=64 * 1024 * 1024,
        ),
        cost_estimate=pl.CostEstimate(
            flops=flops, transcendentals=0, bytes_accessed=bytes_accessed),
    )(x, w1s, b1s, w2s, b2s)


def init_linear_params(key, in_features, out_features, dtype=jnp.float32):
    """PyTorch nn.Linear-style init; weight already transposed to [in, out]."""
    kw, kb = jax.random.split(key)
    bound = 1.0 / math.sqrt(in_features)
    w = jax.random.uniform(kw, (in_features, out_features), dtype=dtype,
                           minval=-bound, maxval=bound)
    b = jax.random.uniform(kb, (out_features,), dtype=dtype,
                           minval=-bound, maxval=bound)
    return w, b


class LlamaHeadPallas:
    """JAX/Pallas equivalent of the PyTorch Llama_head module."""

    def __init__(self, input_size, hidden_size, output_size, key,
                 *, tile_m=256, tile_h=512):
        self.input_size = input_size
        self.hidden_size = hidden_size
        self.output_size = output_size

        k1, k2, k3, k4 = jax.random.split(key, 4)
        # f32 "master" params (user_mlp / item_mlp), kept for reference checks.
        self.u_w1, self.u_b1 = init_linear_params(k1, input_size, hidden_size)
        self.u_w2, self.u_b2 = init_linear_params(k2, hidden_size, output_size)
        self.i_w1, self.i_b1 = init_linear_params(k3, input_size, hidden_size)
        self.i_w2, self.i_b2 = init_linear_params(k4, hidden_size, output_size)

        # Lane-dense padded sizes (multiples of 128).
        self.d_in_pad = _round_up(input_size, 128)
        self.hidden_pad = _round_up(hidden_size, 128)
        self.d_out_pad = _round_up(output_size, 128)
        self.tile_m = max(16, tile_m)
        th = min(tile_h, self.hidden_pad)
        self.tile_h = th if self.hidden_pad % th == 0 else 128

        # Pre-stacked, padded, bf16 weights (built once, not per forward call).
        self.w1s = jnp.stack([
            _pad2d(self.u_w1, self.d_in_pad, self.hidden_pad),
            _pad2d(self.i_w1, self.d_in_pad, self.hidden_pad),
        ]).astype(jnp.bfloat16)
        self.w2s = jnp.stack([
            _pad2d(self.u_w2, self.hidden_pad, self.d_out_pad),
            _pad2d(self.i_w2, self.hidden_pad, self.d_out_pad),
        ]).astype(jnp.bfloat16)
        self.b1s = jnp.stack([
            jnp.pad(self.u_b1, (0, self.hidden_pad - hidden_size)),
            jnp.pad(self.i_b1, (0, self.hidden_pad - hidden_size)),
        ])[:, None, :].astype(jnp.float32)
        self.b2s = jnp.stack([
            jnp.pad(self.u_b2, (0, self.d_out_pad - output_size)),
            jnp.pad(self.i_b2, (0, self.d_out_pad - output_size)),
        ])[:, None, :].astype(jnp.float32)

    def __call__(self, user_origin_emb, item_origin_emb):
        n_u = user_origin_emb.shape[0]
        n_i = item_origin_emb.shape[0]
        max_n = max(n_u, n_i)
        tile_m = min(self.tile_m, _round_up(max_n, 16))
        n_pad = _round_up(max_n, tile_m)

        # Stack + zero-pad both batches so one kernel handles user & item MLPs.
        x = jnp.zeros((2, n_pad, self.d_in_pad), jnp.bfloat16)
        x = x.at[0, :n_u, :self.input_size].set(user_origin_emb.astype(jnp.bfloat16))
        x = x.at[1, :n_i, :self.input_size].set(item_origin_emb.astype(jnp.bfloat16))

        out = fused_mlp_forward(x, self.w1s, self.b1s, self.w2s, self.b2s,
                                tile_m=tile_m, tile_h=self.tile_h)
        user_out = out[0, :n_u, :self.output_size]
        item_out = out[1, :n_i, :self.output_size]
        return user_out, item_out


def _mlp_ref(x, w1, b1, w2, b2):
    """Reference matching the kernel's numerics: bf16 operands, f32 accumulation."""
    h = jnp.dot(x.astype(jnp.bfloat16), w1.astype(jnp.bfloat16),
                preferred_element_type=jnp.float32) + b1
    h = jnp.maximum(h, 0.0).astype(jnp.bfloat16)
    return jnp.dot(h, w2.astype(jnp.bfloat16),
                   preferred_element_type=jnp.float32) + b2


if __name__ == "__main__":
    # Small shapes consistent with the module (real model uses 4096-dim LLaMA
    # embeddings loaded from disk; here deterministic random inputs are used).
    INPUT_SIZE, HIDDEN_SIZE, OUTPUT_SIZE = 96, 192, 48
    N_USERS, N_ITEMS = 192, 160

    key = jax.random.PRNGKey(0)
    k_params, k_user, k_item = jax.random.split(key, 3)

    # tile_h=128 so the demo exercises the hidden-dim reduction/accumulator path.
    model = LlamaHeadPallas(INPUT_SIZE, HIDDEN_SIZE, OUTPUT_SIZE, k_params,
                            tile_m=256, tile_h=128)

    user_origin_emb = jax.random.normal(k_user, (N_USERS, INPUT_SIZE), dtype=jnp.float32)
    item_origin_emb = jax.random.normal(k_item, (N_ITEMS, INPUT_SIZE), dtype=jnp.float32)

    user_out, item_out = model(user_origin_emb, item_origin_emb)
    jax.block_until_ready((user_out, item_out))

    assert user_out.shape == (N_USERS, OUTPUT_SIZE)
    assert item_out.shape == (N_ITEMS, OUTPUT_SIZE)

    # Correctness check against a plain-JAX reference with matching bf16 numerics.
    user_ref = _mlp_ref(user_origin_emb, model.u_w1, model.u_b1, model.u_w2, model.u_b2)
    item_ref = _mlp_ref(item_origin_emb, model.i_w1, model.i_b1, model.i_w2, model.i_b2)
    assert jnp.allclose(user_out, user_ref, atol=2e-2, rtol=2e-2), \
        float(jnp.max(jnp.abs(user_out - user_ref)))
    assert jnp.allclose(item_out, item_ref, atol=2e-2, rtol=2e-2), \
        float(jnp.max(jnp.abs(item_out - item_ref)))

    print("KERNEL_OK")
</pallas_src>

<mosaic_0001>
module attributes {stable_mosaic.version = 11 : i64} {
  func.func @_fused_mlp_kernel(%arg0: i32, %arg1: i32, %arg2: i32, %arg3: memref<1x192x128xbf16, #tpu.memory_space<vmem>>, %arg4: memref<1x128x128xbf16, #tpu.memory_space<vmem>>, %arg5: memref<1x1x128xf32, #tpu.memory_space<vmem>>, %arg6: memref<1x128x128xbf16, #tpu.memory_space<vmem>>, %arg7: memref<1x1x128xf32, #tpu.memory_space<vmem>>, %arg8: memref<1x192x128xf32, #tpu.memory_space<vmem>>, %arg9: memref<192x128xf32, #tpu.memory_space<vmem>>) attributes {dimension_semantics = [#tpu.dimension_semantics<parallel>, #tpu.dimension_semantics<parallel>, #tpu.dimension_semantics<arbitrary>], iteration_bounds = array<i64: 2, 1, 2>, scalar_prefetch = 0 : i64, scratch_operands = 1 : i64, tpu.core_type = #tpu.core_type<tc>, window_params = [{transform_indices = @transform_0, window_bounds = array<i64: 1, 192, 128>}, {transform_indices = @transform_1, window_bounds = array<i64: 1, 128, 128>}, {transform_indices = @transform_2, window_bounds = array<i64: 1, 1, 128>}, {transform_indices = @transform_3, window_bounds = array<i64: 1, 128, 128>}, {transform_indices = @transform_4, window_bounds = array<i64: 1, 1, 128>}, {transform_indices = @transform_5, window_bounds = array<i64: 1, 192, 128>}]} {
    %c0_i32 = arith.constant 0 : i32
    %0 = arith.cmpi eq, %arg2, %c0_i32 : i32
    %1 = arith.extui %0 : i1 to i32
    %c0_i32_0 = arith.constant 0 : i32
    %2 = arith.cmpi ne, %1, %c0_i32_0 : i32
    scf.if %2 {
      %cst_19 = arith.constant 0.000000e+00 : f32
      %24 = vector.broadcast %cst_19 : f32 to vector<192x128xf32>
      %c0_20 = arith.constant 0 : index
      %c0_21 = arith.constant 0 : index
      %25 = vector.load %arg9[%c0_20, %c0_21] : memref<192x128xf32, #tpu.memory_space<vmem>>, vector<192x128xf32>
      tpu.vector_store %arg9[%c0_20, %c0_21], %24 {strides = array<i32>} : memref<192x128xf32, #tpu.memory_space<vmem>>, vector<192x128xf32>,
    } else {
    }
    %c0 = arith.constant 0 : index
    %c0_1 = arith.constant 0 : index
    %c0_2 = arith.constant 0 : index
    %3 = vector.load %arg3[%c0, %c0_1, %c0_2] : memref<1x192x128xbf16, #tpu.memory_space<vmem>>, vector<1x192x128xbf16>
    %4 = vector.shape_cast %3 : vector<1x192x128xbf16> to vector<192x128xbf16>
    %c0_3 = arith.constant 0 : index
    %c0_4 = arith.constant 0 : index
    %c0_5 = arith.constant 0 : index
    %5 = vector.load %arg4[%c0_3, %c0_4, %c0_5] : memref<1x128x128xbf16, #tpu.memory_space<vmem>>, vector<1x128x128xbf16>
    %6 = vector.shape_cast %5 : vector<1x128x128xbf16> to vector<128x128xbf16>
    %cst = arith.constant dense<0.000000e+00> : vector<192x128xf32>
    %7 = tpu.matmul %4, %6, %cst {dimension_numbers = #tpu.dot_dimension_numbers<[1], [0], [0], [1], [0, 0, 1, 1], [], []>} : vector<192x128xbf16>, vector<128x128xbf16>, vector<192x128xf32> -> vector<192x128xf32>
    %c0_6 = arith.constant 0 : index
    %c0_7 = arith.constant 0 : index
    %c0_8 = arith.constant 0 : index
    %8 = vector.load %arg5[%c0_6, %c0_7, %c0_8] : memref<1x1x128xf32, #tpu.memory_space<vmem>>, vector<1x1x128xf32>
    %9 = vector.shape_cast %8 : vector<1x1x128xf32> to vector<1x128xf32>
    %10 = vector.broadcast %9 : vector<1x128xf32> to vector<192x128xf32>
    %11 = arith.addf %7, %10 : vector<192x128xf32>
    %cst_9 = arith.constant 0.000000e+00 : f32
    %12 = vector.broadcast %cst_9 : f32 to vector<192x128xf32>
    %13 = arith.maximumf %11, %12 : vector<192x128xf32>
    %c0_10 = arith.constant 0 : index
    %c0_11 = arith.constant 0 : index
    %14 = vector.load %arg9[%c0_10, %c0_11] : memref<192x128xf32, #tpu.memory_space<vmem>>, vector<192x128xf32>
    %15 = arith.truncf %13 : vector<192x128xf32> to vector<192x128xbf16>
    %c0_12 = arith.constant 0 : index
    %c0_13 = arith.constant 0 : index
    %c0_14 = arith.constant 0 : index
    %16 = vector.load %arg6[%c0_12, %c0_13, %c0_14] : memref<1x128x128xbf16, #tpu.memory_space<vmem>>, vector<1x128x128xbf16>
    %17 = vector.shape_cast %16 : vector<1x128x128xbf16> to vector<128x128xbf16>
    %cst_15 = arith.constant dense<0.000000e+00> : vector<192x128xf32>
    %18 = tpu.matmul %15, %17, %cst_15 {dimension_numbers = #tpu.dot_dimension_numbers<[1], [0], [0], [1], [0, 0, 1, 1], [], []>} : vector<192x128xbf16>, vector<128x128xbf16>, vector<192x128xf32> -> vector<192x128xf32>
    %19 = arith.addf %14, %18 : vector<192x128xf32>
    %c0_16 = arith.constant 0 : index
    %c0_17 = arith.constant 0 : index
    %20 = vector.load %arg9[%c0_16, %c0_17] : memref<192x128xf32, #tpu.memory_space<vmem>>, vector<192x128xf32>
    tpu.vector_store %arg9[%c0_16, %c0_17], %19 {strides = array<i32>} : memref<192x128xf32, #tpu.memory_space<vmem>>, vector<192x128xf32>,
    %c1_i32 = arith.constant 1 : i32
    %21 = arith.cmpi eq, %arg2, %c1_i32 : i32
    %22 = arith.extui %21 : i1 to i32
    %c0_i32_18 = arith.constant 0 : i32
    %23 = arith.cmpi ne, %22, %c0_i32_18 : i32
    scf.if %23 {
      %c0_19 = arith.constant 0 : index
      %c0_20 = arith.constant 0 : index
      %24 = vector.load %arg9[%c0_19, %c0_20] : memref<192x128xf32, #tpu.memory_space<vmem>>, vector<192x128xf32>
      %c0_21 = arith.constant 0 : index
      %c0_22 = arith.constant 0 : index
      %c0_23 = arith.constant 0 : index
      %25 = vector.load %arg7[%c0_21, %c0_22, %c0_23] : memref<1x1x128xf32, #tpu.memory_space<vmem>>, vector<1x1x128xf32>
      %26 = vector.shape_cast %25 : vector<1x1x128xf32> to vector<1x128xf32>
      %27 = vector.broadcast %26 : vector<1x128xf32> to vector<192x128xf32>
      %28 = arith.addf %24, %27 : vector<192x128xf32>
      %c0_24 = arith.constant 0 : index
      %c0_25 = arith.constant 0 : index
      %c0_26 = arith.constant 0 : index
      %29 = vector.load %arg8[%c0_24, %c0_25, %c0_26] : memref<1x192x128xf32, #tpu.memory_space<vmem>>, vector<1x192x128xf32>
      %30 = vector.shape_cast %29 : vector<1x192x128xf32> to vector<192x128xf32>
      %31 = vector.shape_cast %28 : vector<192x128xf32> to vector<1x192x128xf32>
      tpu.vector_store %arg8[%c0_24, %c0_25, %c0_26], %31 {strides = array<i32>} : memref<1x192x128xf32, #tpu.memory_space<vmem>>, vector<1x192x128xf32>,
    } else {
    }
    return
  }
  func.func @transform_0(%arg0: i32, %arg1: i32, %arg2: i32) -> (i32, i32, i32) {
    %c0_i32 = arith.constant 0 : i32
    %c0_i32_0 = arith.constant 0 : i32
    return %arg0, %arg1, %c0_i32 : i32, i32, i32
  }
  func.func @transform_1(%arg0: i32, %arg1: i32, %arg2: i32) -> (i32, i32, i32) {
    %c0_i32 = arith.constant 0 : i32
    %c0_i32_0 = arith.constant 0 : i32
    return %arg0, %c0_i32, %arg2 : i32, i32, i32
  }
  func.func @transform_2(%arg0: i32, %arg1: i32, %arg2: i32) -> (i32, i32, i32) {
    %c0_i32 = arith.constant 0 : i32
    %c0_i32_0 = arith.constant 0 : i32
    return %arg0, %c0_i32, %arg2 : i32, i32, i32
  }
  func.func @transform_3(%arg0: i32, %arg1: i32, %arg2: i32) -> (i32, i32, i32) {
    %c0_i32 = arith.constant 0 : i32
    %c0_i32_0 = arith.constant 0 : i32
    return %arg0, %arg2, %c0_i32 : i32, i32, i32
  }
  func.func @transform_4(%arg0: i32, %arg1: i32, %arg2: i32) -> (i32, i32, i32) {
    %c0_i32 = arith.constant 0 : i32
    %c0_i32_0 = arith.constant 0 : i32
    %c0_i32_1 = arith.constant 0 : i32
    return %arg0, %c0_i32, %c0_i32_0 : i32, i32, i32
  }
  func.func @transform_5(%arg0: i32, %arg1: i32, %arg2: i32) -> (i32, i32, i32) {
    %c0_i32 = arith.constant 0 : i32
    %c0_i32_0 = arith.constant 0 : i32
    return %arg0, %arg1, %c0_i32 : i32, i32, i32
  }
}

</mosaic_0001>

<llo_original>
// kernel: tpu_custom_call.1
$region0: #{tpu_custom_call.1}
  #allocation0 [shape = 'u32[]', space=smem, size = 0x4, offset = 0x4, fixed_abs, tag = 'smem constant byte address 0x4 - core index']
  #allocation1 [shape = 'u32[144,128]{1,0:T(1,128)}', space=vmem, size = 0x12000, scoped, tag = 'internal scratch']
  #allocation2 [shape = 'f32[192,128]{1,0:T(8,128)}', space=vmem, size = 0x18000, scoped, tag = 'scratch operand']
  %s0 = inlined_call_operand.hbm [shape: bf16[2,192,128], index: 0, kind: input, shape index: {}]
  %s1 = inlined_call_operand.hbm [shape: bf16[2,128,256], index: 1, kind: input, shape index: {}]
  %s2 = inlined_call_operand.hbm [shape: f32[2,1,256], index: 2, kind: input, shape index: {}]
  %s3 = inlined_call_operand.hbm [shape: bf16[2,256,128], index: 3, kind: input, shape index: {}]
  %s4 = inlined_call_operand.hbm [shape: f32[2,1,128], index: 4, kind: input, shape index: {}]
  %s5 = inlined_call_operand.hbm [shape: f32[2,192,128], index: 5, kind: output, shape index: {}]
  %s6 = sld [smem:[#allocation0]]
  $region81: #{tpu_custom_call.1} parent=0
    _
  %s8 = ssub.s32 1, %s6
  %s9 = scalar_select 0, %s8, %s6
  $region1: #{tpu_custom_call.1} parent=0
    #allocation3 [shape = 'u8[98304]{0}', space=vmem, size = 0x18000, scoped, tag = 'input window, operand 0']
    #allocation4 [shape = 's32[2]{0}', space=sflag, size = 0x8, scoped, tag = 'scoped memory for tpu_custom_call.1']
    #allocation5 [shape = 's32[2]{0}', space=sflag, size = 0x8, scoped, tag = 'scoped memory for tpu_custom_call.1']
    #allocation6 [shape = 'u8[65536]{0}', space=vmem, size = 0x10000, scoped, tag = 'input window, operand 1']
    #allocation7 [shape = 's32[2]{0}', space=sflag, size = 0x8, scoped, tag = 'scoped memory for tpu_custom_call.1']
    #allocation8 [shape = 'u8[1024]{0}', space=vmem, size = 0x400, scoped, tag = 'input window, operand 2']
    #allocation9 [shape = 'u8[65536]{0}', space=vmem, size = 0x10000, scoped, tag = 'input window, operand 3']
    #allocation10 [shape = 's32[2]{0}', space=sflag, size = 0x8, scoped, tag = 'scoped memory for tpu_custom_call.1']
    #allocation11 [shape = 'u8[1024]{0}', space=vmem, size = 0x400, scoped, tag = 'input window, operand 4']
    #allocation12 [shape = 'u8[196608]{0}', space=vmem, size = 0x30000, scoped, tag = 'output window, operand 0']
    %10 = vsyncpa [#allocation4], 0
    %s11 = scalar_lea.sflag [#allocation4], 1
    %12 = vsyncpa %s11, 0
    %13 = vsyncpa [#allocation7], 0
    %s14 = scalar_lea.sflag [#allocation7], 1
    %15 = vsyncpa %s14, 0
    %16 = vsyncpa [#allocation10], 0
    %s17 = scalar_lea.sflag [#allocation10], 1
    %18 = vsyncpa %s17, 0
    %19 = vsyncpa [#allocation5], 0
    %s20 = scalar_lea.sflag [#allocation5], 1
    %21 = vsyncpa %s20, 0
    loop: start=0, step=1, limit=6
    $region2: #{tpu_custom_call.1} parent=1 // loop_pre_header
      _
    $region3: #{tpu_custom_call.1} parent=1 // loop_header
      %s23 = sphi 0, %s27
      %p24 = scmp.ge.s32.totalorder %s23, 6
      %s30 = sphi 0, %s49
      %s31 = sphi 0, %s45
      %s32 = sphi 0, %s41
      %s33 = sphi 0, %s30
      %s34 = sphi 0, %s31
      %s35 = sphi 0, %s32
      %s36 = sphi 0, %s33
      %s37 = sphi 0, %s34
      %s38 = sphi 0, %s35
      %s54 = sphi 0, %s56
      %s57 = sphi 0, %s54
      %s58 = sphi 0, %s57
      %s74 = sphi 0, %s58
      %s82 = sphi 0, %s84
      %s85 = sphi 0, %s82
      %s86 = sphi 0, %s85
      %s102 = sphi 0, %s86
      %s110 = sphi 0, %s112
      %s113 = sphi 0, %s110
      %s114 = sphi 0, %s113
      %s130 = sphi 0, %s114
      %s138 = sphi 0, %s140
      %s141 = sphi 0, %s138
      %s142 = sphi 0, %s141
      %s158 = sphi 0, %s142
      %s164 = sphi 0, %s166
      %s167 = sphi 0, %s164
      %s168 = sphi 0, %s167
      %s184 = sphi 0, %s168
      %s192 = sphi 0, %s194
      %s195 = sphi 0, %s192
      %s196 = sphi 0, %s195
      %s212 = sphi 0, %s196
    $region4: #{tpu_custom_call.1} parent=1 // loop_header_branch
      %26 = sbr.rel (%p24) target = $region8
    $region5: #{tpu_custom_call.1} parent=1 // loop_body
      %s28 = ssub.s32 %s23, 1
      %s29 = ssub.s32 %s23, 2
      %s39 = sadd.s32 1, %s32
      %p40 = scmp.ge.s32.totalorder %s39, 2
      %s41 = scalar_select %p40, 0, %s39
      %s42 = sadd.s32 1, %s31
      %s43 = scalar_select %p40, %s42, %s31
      %p44 = scmp.ge.s32.totalorder %s43, 1
      %s45 = scalar_select %p44, 0, %s43
      %s46 = sadd.s32 1, %s30
      %s47 = scalar_select %p44, %s46, %s30
      %p48 = scmp.ge.s32.totalorder %s47, 2
      %s49 = scalar_select %p48, 0, %s47
      %s50 = ssub.s32 %s30, %s49
      %s51 = ssub.s32 %s31, %s45
      %s52 = sor.u32 %s50, %s51
      %p53 = scmp.eq.s32.totalorder %s52, 0
      %s55 = sadd.s32 %s54, 1
      %s56 = scalar_select %p53, %s54, %s55
      %p59 = pneg %p53
      %p60 = scmp.eq.s32.totalorder %s23, 3
      %p61 = por %p59, %p60
      %p62 = scmp.ne.s32.totalorder %s54, %s57
      %p63 = scmp.eq.s32.totalorder %s23, 0
      %p64 = por %p62, %p63
      %p65 = scmp.ne.s32.totalorder %s54, %s57
      %p66 = scmp.eq.s32.totalorder %s28, 3
      %p67 = por %p65, %p66
      %p68 = scmp.ne.s32.totalorder %s57, %s58
      %p69 = scmp.eq.s32.totalorder %s28, 0
      %p70 = por %p68, %p69
      %p71 = scmp.ne.s32.totalorder %s57, %s58
      %p72 = scmp.eq.s32.totalorder %s29, 3
      %p73 = por %p71, %p72
      %p75 = scmp.ne.s32.totalorder %s58, %s74
      %p76 = scmp.eq.s32.totalorder %s29, 0
      %p77 = por %p75, %p76
      %s78 = ssub.s32 %s30, %s49
      %s79 = ssub.s32 %s32, %s41
      %s80 = sor.u32 %s78, %s79
      %p81 = scmp.eq.s32.totalorder %s80, 0
      %s83 = sadd.s32 %s82, 1
      %s84 = scalar_select %p81, %s82, %s83
      %p87 = pneg %p81
      %p88 = scmp.eq.s32.totalorder %s23, 3
      %p89 = por %p87, %p88
      %p90 = scmp.ne.s32.totalorder %s82, %s85
      %p91 = scmp.eq.s32.totalorder %s23, 0
      %p92 = por %p90, %p91
      %p93 = scmp.ne.s32.totalorder %s82, %s85
      %p94 = scmp.eq.s32.totalorder %s28, 3
      %p95 = por %p93, %p94
      %p96 = scmp.ne.s32.totalorder %s85, %s86
      %p97 = scmp.eq.s32.totalorder %s28, 0
      %p98 = por %p96, %p97
      %p99 = scmp.ne.s32.totalorder %s85, %s86
      %p100 = scmp.eq.s32.totalorder %s29, 3
      %p101 = por %p99, %p100
      %p103 = scmp.ne.s32.totalorder %s86, %s102
      %p104 = scmp.eq.s32.totalorder %s29, 0
      %p105 = por %p103, %p104
      %s106 = ssub.s32 %s30, %s49
      %s107 = ssub.s32 %s32, %s41
      %s108 = sor.u32 %s106, %s107
      %p109 = scmp.eq.s32.totalorder %s108, 0
      %s111 = sadd.s32 %s110, 1
      %s112 = scalar_select %p109, %s110, %s111
      %p115 = pneg %p109
      %p116 = scmp.eq.s32.totalorder %s23, 3
      %p117 = por %p115, %p116
      %p118 = scmp.ne.s32.totalorder %s110, %s113
      %p119 = scmp.eq.s32.totalorder %s23, 0
      %p120 = por %p118, %p119
      %p121 = scmp.ne.s32.totalorder %s110, %s113
      %p122 = scmp.eq.s32.totalorder %s28, 3
      %p123 = por %p121, %p122
      %p124 = scmp.ne.s32.totalorder %s113, %s114
      %p125 = scmp.eq.s32.totalorder %s28, 0
      %p126 = por %p124, %p125
      %p127 = scmp.ne.s32.totalorder %s113, %s114
      %p128 = scmp.eq.s32.totalorder %s29, 3
      %p129 = por %p127, %p128
      %p131 = scmp.ne.s32.totalorder %s114, %s130
      %p132 = scmp.eq.s32.totalorder %s29, 0
      %p133 = por %p131, %p132
      %s134 = ssub.s32 %s30, %s49
      %s135 = ssub.s32 %s32, %s41
      %s136 = sor.u32 %s134, %s135
      %p137 = scmp.eq.s32.totalorder %s136, 0
      %s139 = sadd.s32 %s138, 1
      %s140 = scalar_select %p137, %s138, %s139
      %p143 = pneg %p137
      %p144 = scmp.eq.s32.totalorder %s23, 3
      %p145 = por %p143, %p144
      %p146 = scmp.ne.s32.totalorder %s138, %s141
      %p147 = scmp.eq.s32.totalorder %s23, 0
      %p148 = por %p146, %p147
      %p149 = scmp.ne.s32.totalorder %s138, %s141
      %p150 = scmp.eq.s32.totalorder %s28, 3
      %p151 = por %p149, %p150
      %p152 = scmp.ne.s32.totalorder %s141, %s142
      %p153 = scmp.eq.s32.totalorder %s28, 0
      %p154 = por %p152, %p153
      %p155 = scmp.ne.s32.totalorder %s141, %s142
      %p156 = scmp.eq.s32.totalorder %s29, 3
      %p157 = por %p155, %p156
      %p159 = scmp.ne.s32.totalorder %s142, %s158
      %p160 = scmp.eq.s32.totalorder %s29, 0
      %p161 = por %p159, %p160
      %s162 = ssub.s32 %s30, %s49
      %p163 = scmp.eq.s32.totalorder %s162, 0
      %s165 = sadd.s32 %s164, 1
      %s166 = scalar_select %p163, %s164, %s165
      %p169 = pneg %p163
      %p170 = scmp.eq.s32.totalorder %s23, 3
      %p171 = por %p169, %p170
      %p172 = scmp.ne.s32.totalorder %s164, %s167
      %p173 = scmp.eq.s32.totalorder %s23, 0
      %p174 = por %p172, %p173
      %p175 = scmp.ne.s32.totalorder %s164, %s167
      %p176 = scmp.eq.s32.totalorder %s28, 3
      %p177 = por %p175, %p176
      %p178 = scmp.ne.s32.totalorder %s167, %s168
      %p179 = scmp.eq.s32.totalorder %s28, 0
      %p180 = por %p178, %p179
      %p181 = scmp.ne.s32.totalorder %s167, %s168
      %p182 = scmp.eq.s32.totalorder %s29, 3
      %p183 = por %p181, %p182
      %p185 = scmp.ne.s32.totalorder %s168, %s184
      %p186 = scmp.eq.s32.totalorder %s29, 0
      %p187 = por %p185, %p186
      %s188 = ssub.s32 %s30, %s49
      %s189 = ssub.s32 %s31, %s45
      %s190 = sor.u32 %s188, %s189
      %p191 = scmp.eq.s32.totalorder %s190, 0
      %s193 = sadd.s32 %s192, 1
      %s194 = scalar_select %p191, %s192, %s193
      %p197 = pneg %p191
      %p198 = scmp.eq.s32.totalorder %s23, 3
      %p199 = por %p197, %p198
      %p200 = scmp.ne.s32.totalorder %s192, %s195
      %p201 = scmp.eq.s32.totalorder %s23, 0
      %p202 = por %p200, %p201
      %p203 = scmp.ne.s32.totalorder %s192, %s195
      %p204 = scmp.eq.s32.totalorder %s28, 3
      %p205 = por %p203, %p204
      %p206 = scmp.ne.s32.totalorder %s195, %s196
      %p207 = scmp.eq.s32.totalorder %s28, 0
      %p208 = por %p206, %p207
      %p209 = scmp.ne.s32.totalorder %s195, %s196
      %p210 = scmp.eq.s32.totalorder %s29, 3
      %p211 = por %p209, %p210
      %p213 = scmp.ne.s32.totalorder %s196, %s212
      %p214 = scmp.eq.s32.totalorder %s29, 0
      %p215 = por %p213, %p214
      %p216 = scmp.le.s32.totalorder 1, %s23
      %p217 = scmp.lt.s32.totalorder %s23, 5
      %p218 = pnand %p216, %p217
      %p219 = pneg %p218
      // Predicated region
      $region9: #{tpu_custom_call.1} parent=5 // pred_check
        _
      $region10: #{tpu_custom_call.1} parent=5 // pred_check_branch
        %221 = sbr.rel (%p218) target = $region12
      $region11: #{tpu_custom_call.1} parent=5 // pred_region
        %s222 = ssub.s32 %s23, 1
      $region12: #{tpu_custom_call.1} parent=5 // pred_fallthru
        _
      %p223 = scmp.lt.s32.totalorder %s23, 4
      // Predicated region
      $region13: #{tpu_custom_call.1} parent=5 // pred_check
        %p224 = pneg %p223
      $region14: #{tpu_custom_call.1} parent=5 // pred_check_branch
        %226 = sbr.rel (%p224) target = $region16
      $region15: #{tpu_custom_call.1} parent=5 // pred_region
        // Predicated region
        $region17: #{tpu_custom_call.1} parent=15 // pred_check
          %p227 = pneg %p64
        $region18: #{tpu_custom_call.1} parent=15 // pred_check_branch
          %229 = sbr.rel (%p227) target = $region20
        $region19: #{tpu_custom_call.1} parent=15 // pred_region
          %s230 = sand.u32 %s54, 1
          %s231 = scalar_lea.sflag [#allocation4], %s230
          %s232 = sand.u32 %s54, 1
          %s233 = smul.addr %s232, 96
          %s234 = scalar_lea.vmem [#allocation3], %s233
          %s235 = smul.u32 24, %s31
          %s237 = ssub.s32 1536, 1536
          %238 = vsyncadd %s231, %s237
          %s239 = smul.addr %s30, 24
          %s240 = sadd.s32 %s235, %s239
          %s241 = smul.addr %s240, 64
          %s242 = scalar_lea.hbm %s0, %s241
          %s243 = sshll.u32 %s234, 4
          %s244 = int_to_ptr.vmem [resolvable:$true] %s243
          %249 = dma.hbm_to_vmem [thread:$0]  %s242, 1536, %s244, %s231, 64, 64, 4
        $region20: #{tpu_custom_call.1} parent=15 // pred_fallthru
          _
        // Predicated region
        $region21: #{tpu_custom_call.1} parent=15 // pred_check
          %p250 = pneg %p92
        $region22: #{tpu_custom_call.1} parent=15 // pred_check_branch
          %252 = sbr.rel (%p250) target = $region24
        $region23: #{tpu_custom_call.1} parent=15 // pred_region
          %s253 = sand.u32 %s23, 1
          %s254 = scalar_lea.sflag [#allocation7], %s253
          %s255 = sand.u32 %s82, 1
          %s256 = smul.addr %s255, 64
          %s257 = scalar_lea.vmem [#allocation6], %s256
          %s259 = ssub.s32 1024, 1024
          %260 = vsyncadd %s254, %s259
          %s261 = smul.addr %s30, 32
          %s262 = sadd.s32 %s32, %s261
          %s263 = smul.addr %s262, 64
          %s264 = scalar_lea.hbm %s1, %s263
          %s265 = sshll.u32 %s257, 4
          %s266 = int_to_ptr.vmem [resolvable:$true] %s265
          %271 = dma.hbm_to_vmem [thread:$0]  %s264, 1024, %s266, %s254, 128, 64, 4
        $region24: #{tpu_custom_call.1} parent=15 // pred_fallthru
          _
        // Predicated region
        $region25: #{tpu_custom_call.1} parent=15 // pred_check
          %p272 = pneg %p120
        $region26: #{tpu_custom_call.1} parent=15 // pred_check_branch
          %274 = sbr.rel (%p272) target = $region28
        $region27: #{tpu_custom_call.1} parent=15 // pred_region
          %s275 = sand.u32 %s23, 1
          %s276 = scalar_lea.sflag [#allocation7], %s275
          %s277 = sand.u32 %s110, 1
          %s278 = scalar_lea.vmem [#allocation8], %s277
          %s280 = ssub.s32 16, 16
          %281 = vsyncadd %s276, %s280
          %s282 = smul.addr %s30, 2
          %s283 = sadd.s32 %s32, %s282
          %s284 = smul.addr %s283, 16
          %s285 = scalar_lea.hbm %s2, %s284
          %s287 = sshll.u32 %s278, 4
          %s288 = int_to_ptr.vmem [resolvable:$true] %s287
          %290 = dma.hbm_to_vmem [thread:$0]  %s285, 16, %s288, %s276
        $region28: #{tpu_custom_call.1} parent=15 // pred_fallthru
          _
        // Predicated region
        $region29: #{tpu_custom_call.1} parent=15 // pred_check
          %p291 = pneg %p148
        $region30: #{tpu_custom_call.1} parent=15 // pred_check_branch
          %293 = sbr.rel (%p291) target = $region32
        $region31: #{tpu_custom_call.1} parent=15 // pred_region
          %s294 = sand.u32 %s23, 1
          %s295 = scalar_lea.sflag [#allocation10], %s294
          %s296 = sand.u32 %s138, 1
          %s297 = smul.addr %s296, 64
          %s298 = scalar_lea.vmem [#allocation9], %s297
          %s299 = smul.u32 16, %s32
          %s301 = ssub.s32 1024, 1024
          %302 = vsyncadd %s295, %s301
          %s303 = smul.addr %s30, 32
          %s304 = sadd.s32 %s299, %s303
          %s305 = smul.addr %s304, 64
          %s306 = scalar_lea.hbm %s3, %s305
          %s307 = sshll.u32 %s298, 4
          %s308 = int_to_ptr.vmem [resolvable:$true] %s307
          %313 = dma.hbm_to_vmem [thread:$0]  %s306, 1024, %s308, %s295, 64, 64, 4
        $region32: #{tpu_custom_call.1} parent=15 // pred_fallthru
          _
        // Predicated region
        $region33: #{tpu_custom_call.1} parent=15 // pred_check
          %p314 = pneg %p174
        $region34: #{tpu_custom_call.1} parent=15 // pred_check_branch
          %316 = sbr.rel (%p314) target = $region36
        $region35: #{tpu_custom_call.1} parent=15 // pred_region
          %s317 = sand.u32 %s23, 1
          %s318 = scalar_lea.sflag [#allocation10], %s317
          %s319 = sand.u32 %s164, 1
          %s320 = scalar_lea.vmem [#allocation11], %s319
          %s322 = ssub.s32 16, 16
          %323 = vsyncadd %s318, %s322
          %s324 = smul.addr %s30, 16
          %s325 = scalar_lea.hbm %s4, %s324
          %s327 = sshll.u32 %s320, 4
          %s328 = int_to_ptr.vmem [resolvable:$true] %s327
          %330 = dma.hbm_to_vmem [thread:$0]  %s325, 16, %s328, %s318
        $region36: #{tpu_custom_call.1} parent=15 // pred_fallthru
          _
      $region16: #{tpu_custom_call.1} parent=5 // pred_fallthru
        _
      %p331 = scmp.le.s32.totalorder 1, %s23
      %p332 = scmp.lt.s32.totalorder %s23, 5
      %p333 = pnand %p331, %p332
      %p334 = pneg %p333
      // Predicated region
      $region37: #{tpu_custom_call.1} parent=5 // pred_check
        _
      $region38: #{tpu_custom_call.1} parent=5 // pred_check_branch
        %336 = sbr.rel (%p333) target = $region40
      $region39: #{tpu_custom_call.1} parent=5 // pred_region
        %s337 = ssub.s32 %s23, 1
        %s338 = sand.u32 %s57, 1
        %s339 = scalar_lea.sflag [#allocation4], %s338
        %s340 = sand.u32 %s57, 1
        %s341 = smul.addr %s340, 96
        %s342 = scalar_lea.vmem [#allocation3], %s341
        // Predicated region
        $region41: #{tpu_custom_call.1} parent=39 // pred_check
          %p343 = pneg %p70
        $region42: #{tpu_custom_call.1} parent=39 // pred_check_branch
          %345 = sbr.rel (%p343) target = $region44
        $region43: #{tpu_custom_call.1} parent=39 // pred_region
          %346 = dma.done %s339, 1536
        $region44: #{tpu_custom_call.1} parent=39 // pred_fallthru
          _
        %s347 = sand.u32 %s28, 1
        %s348 = scalar_lea.sflag [#allocation7], %s347
        %s349 = sand.u32 %s85, 1
        %s350 = smul.addr %s349, 64
        %s351 = scalar_lea.vmem [#allocation6], %s350
        // Predicated region
        $region45: #{tpu_custom_call.1} parent=39 // pred_check
          %p352 = pneg %p98
        $region46: #{tpu_custom_call.1} parent=39 // pred_check_branch
          %354 = sbr.rel (%p352) target = $region48
        $region47: #{tpu_custom_call.1} parent=39 // pred_region
          %355 = dma.done %s348, 1024
        $region48: #{tpu_custom_call.1} parent=39 // pred_fallthru
          _
        %s356 = sand.u32 %s28, 1
        %s357 = scalar_lea.sflag [#allocation7], %s356
        %s358 = sand.u32 %s113, 1
        %s359 = scalar_lea.vmem [#allocation8], %s358
        // Predicated region
        $region49: #{tpu_custom_call.1} parent=39 // pred_check
          %p360 = pneg %p126
        $region50: #{tpu_custom_call.1} parent=39 // pred_check_branch
          %362 = sbr.rel (%p360) target = $region52
        $region51: #{tpu_custom_call.1} parent=39 // pred_region
          %363 = dma.done %s357, 16
        $region52: #{tpu_custom_call.1} parent=39 // pred_fallthru
          _
        %s364 = sand.u32 %s28, 1
        %s365 = scalar_lea.sflag [#allocation10], %s364
        %s366 = sand.u32 %s141, 1
        %s367 = smul.addr %s366, 64
        %s368 = scalar_lea.vmem [#allocation9], %s367
        // Predicated region
        $region53: #{tpu_custom_call.1} parent=39 // pred_check
          %p369 = pneg %p154
        $region54: #{tpu_custom_call.1} parent=39 // pred_check_branch
          %371 = sbr.rel (%p369) target = $region56
        $region55: #{tpu_custom_call.1} parent=39 // pred_region
          %372 = dma.done %s365, 1024
        $region56: #{tpu_custom_call.1} parent=39 // pred_fallthru
          _
        %s373 = sand.u32 %s28, 1
        %s374 = scalar_lea.sflag [#allocation10], %s373
        %s375 = sand.u32 %s167, 1
        %s376 = scalar_lea.vmem [#allocation11], %s375
        // Predicated region
        $region57: #{tpu_custom_call.1} parent=39 // pred_check
          %p377 = pneg %p180
        $region58: #{tpu_custom_call.1} parent=39 // pred_check_branch
          %379 = sbr.rel (%p377) target = $region60
        $region59: #{tpu_custom_call.1} parent=39 // pred_region
          %380 = dma.done %s374, 16
        $region60: #{tpu_custom_call.1} parent=39 // pred_fallthru
          _
        %s381 = sand.u32 %s57, 1
        %s382 = scalar_lea.sflag [#allocation4], %s381
        %s383 = sand.u32 %s57, 1
        %s384 = smul.addr %s383, 96
        %s385 = scalar_lea.vmem [#allocation3], %s384
        %p386 = pneg %p70
        %p387 = pneg %p67
        %s388 = sand.u32 %s28, 1
        %s389 = scalar_lea.sflag [#allocation7], %s388
        %s390 = sand.u32 %s85, 1
        %s391 = smul.addr %s390, 64
        %s392 = scalar_lea.vmem [#allocation6], %s391
        %p393 = pneg %p98
        %p394 = pneg %p95
        %s395 = sand.u32 %s28, 1
        %s396 = scalar_lea.sflag [#allocation7], %s395
        %s397 = sand.u32 %s113, 1
        %s398 = scalar_lea.vmem [#allocation8], %s397
        %p399 = pneg %p126
        %p400 = pneg %p123
        %s401 = sand.u32 %s28, 1
        %s402 = scalar_lea.sflag [#allocation10], %s401
        %s403 = sand.u32 %s141, 1
        %s404 = smul.addr %s403, 64
        %s405 = scalar_lea.vmem [#allocation9], %s404
        %p406 = pneg %p154
        %p407 = pneg %p151
        %s408 = sand.u32 %s28, 1
        %s409 = scalar_lea.sflag [#allocation10], %s408
        %s410 = sand.u32 %s167, 1
        %s411 = scalar_lea.vmem [#allocation11], %s410
        %p412 = pneg %p180
        %p413 = pneg %p177
        %p414 = pneg %p208
        %p415 = pneg %p205
        %s416 = sand.u32 %s195, 1
        %s417 = scalar_lea.sflag [#allocation5], %s416
        %s418 = sand.u32 %s195, 1
        %s419 = smul.addr %s418, 192
        %s420 = scalar_lea.vmem [#allocation12], %s419
        %s421 = smul.u32 24, %s34
        %s422 = smul.u32 16, %s35
        %s423 = smul.u32 24, %s34
        %p425 = scmp.eq.s32.totalorder %s35, 0
        // Predicated region
        $region61: #{tpu_custom_call.1} parent=39 // pred_check
          %p426 = pneg %p425
        $region62: #{tpu_custom_call.1} parent=39 // pred_check_branch
          %428 = sbr.rel (%p426) target = $region64
        $region63: #{tpu_custom_call.1} parent=39 // pred_region
          %429 = vst [vmem:[#allocation2] sm:$0xff] 0.0
          %430 = vst [vmem:[#allocation2 + $0x8] sm:$0xff] 0.0
          %431 = vst [vmem:[#allocation2 + $0x10] sm:$0xff] 0.0
          %432 = vst [vmem:[#allocation2 + $0x18] sm:$0xff] 0.0
          %433 = vst [vmem:[#allocation2 + $0x20] sm:$0xff] 0.0
          %434 = vst [vmem:[#allocation2 + $0x28] sm:$0xff] 0.0
          %435 = vst [vmem:[#allocation2 + $0x30] sm:$0xff] 0.0
          %436 = vst [vmem:[#allocation2 + $0x38] sm:$0xff] 0.0
          %437 = vst [vmem:[#allocation2 + $0x40] sm:$0xff] 0.0
          %438 = vst [vmem:[#allocation2 + $0x48] sm:$0xff] 0.0
          %439 = vst [vmem:[#allocation2 + $0x50] sm:$0xff] 0.0
          %440 = vst [vmem:[#allocation2 + $0x58] sm:$0xff] 0.0
          %441 = vst [vmem:[#allocation2 + $0x60] sm:$0xff] 0.0
          %442 = vst [vmem:[#allocation2 + $0x68] sm:$0xff] 0.0
          %443 = vst [vmem:[#allocation2 + $0x70] sm:$0xff] 0.0
          %444 = vst [vmem:[#allocation2 + $0x78] sm:$0xff] 0.0
          %445 = vst [vmem:[#allocation2 + $0x80] sm:$0xff] 0.0
          %446 = vst [vmem:[#allocation2 + $0x88] sm:$0xff] 0.0
          %447 = vst [vmem:[#allocation2 + $0x90] sm:$0xff] 0.0
          %448 = vst [vmem:[#allocation2 + $0x98] sm:$0xff] 0.0
          %449 = vst [vmem:[#allocation2 + $0xa0] sm:$0xff] 0.0
          %450 = vst [vmem:[#allocation2 + $0xa8] sm:$0xff] 0.0
          %451 = vst [vmem:[#allocation2 + $0xb0] sm:$0xff] 0.0
          %452 = vst [vmem:[#allocation2 + $0xb8] sm:$0xff] 0.0
        $region64: #{tpu_custom_call.1} parent=39 // pred_fallthru
          _
        %v453 = vld [vmem:[%s342] sm:$0xf]
        %v454 = vld [vmem:[%s342 + $0x4] sm:$0xf]
        %v455 = vld [vmem:[%s342 + $0x8] sm:$0xf]
        %v456 = vld [vmem:[%s342 + $0xc] sm:$0xf]
        %v457 = vld [vmem:[%s342 + $0x10] sm:$0xf]
        %v458 = vld [vmem:[%s342 + $0x14] sm:$0xf]
        %v459 = vld [vmem:[%s342 + $0x18] sm:$0xf]
        %v460 = vld [vmem:[%s342 + $0x1c] sm:$0xf]
        %v461 = vld [vmem:[%s342 + $0x20] sm:$0xf]
        %v462 = vld [vmem:[%s342 + $0x24] sm:$0xf]
        %v463 = vld [vmem:[%s342 + $0x28] sm:$0xf]
        %v464 = vld [vmem:[%s342 + $0x2c] sm:$0xf]
        %v465 = vld [vmem:[%s342 + $0x30] sm:$0xf]
        %v466 = vld [vmem:[%s342 + $0x34] sm:$0xf]
        %v467 = vld [vmem:[%s342 + $0x38] sm:$0xf]
        %v468 = vld [vmem:[%s342 + $0x3c] sm:$0xf]
        %v469 = vld [vmem:[%s342 + $0x40] sm:$0xf]
        %v470 = vld [vmem:[%s342 + $0x44] sm:$0xf]
        %v471 = vld [vmem:[%s342 + $0x48] sm:$0xf]
        %v472 = vld [vmem:[%s342 + $0x4c] sm:$0xf]
        %v473 = vld [vmem:[%s342 + $0x50] sm:$0xf]
        %v474 = vld [vmem:[%s342 + $0x54] sm:$0xf]
        %v475 = vld [vmem:[%s342 + $0x58] sm:$0xf]
        %v476 = vld [vmem:[%s342 + $0x5c] sm:$0xf]
        %v477 = vld [vmem:[%s351] sm:$0xf]
        %v478 = vld [vmem:[%s351 + $0x4] sm:$0xf]
        %v479 = vld [vmem:[%s351 + $0x8] sm:$0xf]
        %v480 = vld [vmem:[%s351 + $0xc] sm:$0xf]
        %v481 = vld [vmem:[%s351 + $0x10] sm:$0xf]
        %v482 = vld [vmem:[%s351 + $0x14] sm:$0xf]
        %v483 = vld [vmem:[%s351 + $0x18] sm:$0xf]
        %v484 = vld [vmem:[%s351 + $0x1c] sm:$0xf]
        %v485 = vld [vmem:[%s351 + $0x20] sm:$0xf]
        %v486 = vld [vmem:[%s351 + $0x24] sm:$0xf]
        %v487 = vld [vmem:[%s351 + $0x28] sm:$0xf]
        %v488 = vld [vmem:[%s351 + $0x2c] sm:$0xf]
        %v489 = vld [vmem:[%s351 + $0x30] sm:$0xf]
        %v490 = vld [vmem:[%s351 + $0x34] sm:$0xf]
        %v491 = vld [vmem:[%s351 + $0x38] sm:$0xf]
        %v492 = vld [vmem:[%s351 + $0x3c] sm:$0xf]
        %v493 = vld [vmem:[%s359] sm:$0x1]
        %v495 = vlaneseq
        %v496 = vshrl.u32 %v495, 7
        %v497 = vsub.s32 0, %v496
        %v498 = vrot.slane %v493, %v497
        %v524 = vunpack.c.l.b16 %v453
        %v525 = vunpack.c.l.b16 %v454
        %v526 = vunpack.c.l.b16 %v455
        %v527 = vunpack.c.l.b16 %v456
        %v528 = vunpack.c.l.b16 %v457
        %v529 = vunpack.c.l.b16 %v458
        %v530 = vunpack.c.l.b16 %v459
        %v531 = vunpack.c.l.b16 %v460
        %v532 = vunpack.c.l.b16 %v461
        %v533 = vunpack.c.l.b16 %v462
        %v534 = vunpack.c.l.b16 %v463
        %v535 = vunpack.c.l.b16 %v464
        %v536 = vunpack.c.l.b16 %v465
        %v537 = vunpack.c.l.b16 %v466
        %v538 = vunpack.c.l.b16 %v467
        %v539 = vunpack.c.l.b16 %v468
        %v540 = vunpack.c.l.b16 %v469
        %v541 = vunpack.c.l.b16 %v470
        %v542 = vunpack.c.l.b16 %v471
        %v543 = vunpack.c.l.b16 %v472
        %v544 = vunpack.c.l.b16 %v473
        %v545 = vunpack.c.l.b16 %v474
        %v546 = vunpack.c.l.b16 %v475
        %v547 = vunpack.c.l.b16 %v476
        %v548 = vpack.c.b16 %v525, %v524
        %v549 = vpack.c.b16 %v527, %v526
        %v550 = vpack.c.b16 %v529, %v528
        %v551 = vpack.c.b16 %v531, %v530
        %v552 = vpack.c.b16 %v533, %v532
        %v553 = vpack.c.b16 %v535, %v534
        %v554 = vpack.c.b16 %v537, %v536
        %v555 = vpack.c.b16 %v539, %v538
        %v556 = vpack.c.b16 %v541, %v540
        %v557 = vpack.c.b16 %v543, %v542
        %v558 = vpack.c.b16 %v545, %v544
        %v559 = vpack.c.b16 %v547, %v546
        %v588 = vunpack.c.l.b16 %v477
        %v589 = vunpack.c.l.b16 %v478
        %v590 = vunpack.c.l.b16 %v479
        %v591 = vunpack.c.l.b16 %v480
        %v592 = vunpack.c.l.b16 %v481
        %v593 = vunpack.c.l.b16 %v482
        %v594 = vunpack.c.l.b16 %v483
        %v595 = vunpack.c.l.b16 %v484
        %v596 = vunpack.c.l.b16 %v485
        %v597 = vunpack.c.l.b16 %v486
        %v598 = vunpack.c.l.b16 %v487
        %v599 = vunpack.c.l.b16 %v488
        %v600 = vunpack.c.l.b16 %v489
        %v601 = vunpack.c.l.b16 %v490
        %v602 = vunpack.c.l.b16 %v491
        %v603 = vunpack.c.l.b16 %v492
        %v604 = vpack.c.b16 %v589, %v588
        %v605 = vpack.c.b16 %v591, %v590
        %v606 = vpack.c.b16 %v593, %v592
        %v607 = vpack.c.b16 %v595, %v594
        %v608 = vpack.c.b16 %v597, %v596
        %v609 = vpack.c.b16 %v599, %v598
        %v610 = vpack.c.b16 %v601, %v600
        %v611 = vpack.c.b16 %v603, %v602
        %620 = vmatprep.subr.bf16.mxu0 0
        %621 = vmatpush1.bf16.msra.mxu0 %v604
        %622 = vmatprep.subr.bf16.mxu0 0
        %623 = vmatpush1.bf16.msra.mxu0 %v605
        %624 = vmatprep.subr.bf16.mxu0 0
        %625 = vmatpush1.bf16.msra.mxu0 %v606
        %626 = vmatprep.subr.bf16.mxu0 0
        %627 = vmatpush1.bf16.msra.mxu0 %v607
        %628 = vmatprep.subr.bf16.mxu0 0
        %629 = vmatpush1.bf16.msra.mxu0 %v608
        %630 = vmatprep.subr.bf16.mxu0 0
        %631 = vmatpush1.bf16.msra.mxu0 %v609
        %632 = vmatprep.subr.bf16.mxu0 0
        %633 = vmatpush1.bf16.msra.mxu0 %v610
        %634 = vmatprep.subr.bf16.mxu0 0
        %635 = vmatpush1.bf16.msra.mxu0 %v611
        %636 = vmatprep.subr.bf16.mxu0 0
        %637 = vmatpush1.bf16.msra.mxu0 0
        %638 = vmatprep.subr.bf16.mxu0 0
        %639 = vmatpush1.bf16.msra.mxu0 0
        %640 = vmatprep.subr.bf16.mxu0 0
        %641 = vmatpush1.bf16.msra.mxu0 0
        %642 = vmatprep.subr.bf16.mxu0 0
        %643 = vmatpush1.bf16.msra.mxu0 0
        %644 = vmatprep.subr.bf16.mxu0 0
        %645 = vmatpush1.bf16.msra.mxu0 0
        %646 = vmatprep.subr.bf16.mxu0 0
        %647 = vmatpush1.bf16.msra.mxu0 0
        %648 = vmatprep.subr.bf16.mxu0 0
        %649 = vmatpush1.bf16.msra.mxu0 0
        %650 = vmatprep.subr.bf16.mxu0 0
        %651 = vmatpush1.bf16.msra.mxu0 0
        %652 = vmatprep.mubr.bf16.mxu0 0
        %653 = vmatmul.mubr.bf16.gmra.mrb[0].mxu0 %v548
        %v654 = vpop.f32.mrb[0].mxu0
        %v655 = vadd.f32 %v498, %v654
        %v656 = vpop.f32.mrb[0].mxu0
        %v657 = vpop.f32.mrb[0].mxu0
        %v658 = vadd.f32 %v498, %v657
        %v659 = vpop.f32.mrb[0].mxu0
        %660 = vmatprep.mubr.bf16.mxu0 0
        %661 = vmatmul.mubr.bf16.gmra.mrb[0].mxu0 %v549
        %v662 = vpop.f32.mrb[0].mxu0
        %v663 = vadd.f32 %v498, %v662
        %v664 = vpop.f32.mrb[0].mxu0
        %v665 = vpop.f32.mrb[0].mxu0
        %v666 = vadd.f32 %v498, %v665
        %v667 = vpop.f32.mrb[0].mxu0
        %668 = vmatprep.mubr.bf16.mxu0 0
        %669 = vmatmul.mubr.bf16.gmra.mrb[0].mxu0 %v550
        %v670 = vpop.f32.mrb[0].mxu0
        %v671 = vadd.f32 %v498, %v670
        %v672 = vpop.f32.mrb[0].mxu0
        %v673 = vpop.f32.mrb[0].mxu0
        %v674 = vadd.f32 %v498, %v673
        %v675 = vpop.f32.mrb[0].mxu0
        %676 = vmatprep.mubr.bf16.mxu0 0
        %677 = vmatmul.mubr.bf16.gmra.mrb[0].mxu0 %v551
        %v678 = vpop.f32.mrb[0].mxu0
        %v679 = vadd.f32 %v498, %v678
        %v680 = vpop.f32.mrb[0].mxu0
        %v681 = vpop.f32.mrb[0].mxu0
        %v682 = vadd.f32 %v498, %v681
        %v683 = vpop.f32.mrb[0].mxu0
        %684 = vmatprep.mubr.bf16.mxu0 0
        %685 = vmatmul.mubr.bf16.gmra.mrb[0].mxu0 %v552
        %v686 = vpop.f32.mrb[0].mxu0
        %v687 = vadd.f32 %v498, %v686
        %v688 = vpop.f32.mrb[0].mxu0
        %v689 = vpop.f32.mrb[0].mxu0
        %v690 = vadd.f32 %v498, %v689
        %v691 = vpop.f32.mrb[0].mxu0
        %692 = vmatprep.mubr.bf16.mxu0 0
        %693 = vmatmul.mubr.bf16.gmra.mrb[0].mxu0 %v553
        %v694 = vpop.f32.mrb[0].mxu0
        %v695 = vadd.f32 %v498, %v694
        %v696 = vpop.f32.mrb[0].mxu0
        %v697 = vpop.f32.mrb[0].mxu0
        %v698 = vadd.f32 %v498, %v697
        %v699 = vpop.f32.mrb[0].mxu0
        %700 = vmatprep.mubr.bf16.mxu0 0
        %701 = vmatmul.mubr.bf16.gmra.mrb[0].mxu0 %v554
        %v702 = vpop.f32.mrb[0].mxu0
        %v703 = vadd.f32 %v498, %v702
        %v704 = vpop.f32.mrb[0].mxu0
        %v705 = vpop.f32.mrb[0].mxu0
        %v706 = vadd.f32 %v498, %v705
        %v707 = vpop.f32.mrb[0].mxu0
        %708 = vmatprep.mubr.bf16.mxu0 0
        %709 = vmatmul.mubr.bf16.gmra.mrb[0].mxu0 %v555
        %v710 = vpop.f32.mrb[0].mxu0
        %v711 = vadd.f32 %v498, %v710
        %v712 = vpop.f32.mrb[0].mxu0
        %v713 = vpop.f32.mrb[0].mxu0
        %v714 = vadd.f32 %v498, %v713
        %v715 = vpop.f32.mrb[0].mxu0
        %716 = vmatprep.mubr.bf16.mxu0 0
        %717 = vmatmul.mubr.bf16.gmra.mrb[0].mxu0 %v556
        %v718 = vpop.f32.mrb[0].mxu0
        %v719 = vadd.f32 %v498, %v718
        %v720 = vpop.f32.mrb[0].mxu0
        %v721 = vpop.f32.mrb[0].mxu0
        %v722 = vadd.f32 %v498, %v721
        %v723 = vpop.f32.mrb[0].mxu0
        %724 = vmatprep.mubr.bf16.mxu0 0
        %725 = vmatmul.mubr.bf16.gmra.mrb[0].mxu0 %v557
        %v726 = vpop.f32.mrb[0].mxu0
        %v727 = vadd.f32 %v498, %v726
        %v728 = vpop.f32.mrb[0].mxu0
        %v729 = vpop.f32.mrb[0].mxu0
        %v730 = vadd.f32 %v498, %v729
        %v731 = vpop.f32.mrb[0].mxu0
        %732 = vmatprep.mubr.bf16.mxu0 0
        %733 = vmatmul.mubr.bf16.gmra.mrb[0].mxu0 %v558
        %v734 = vpop.f32.mrb[0].mxu0
        %v735 = vadd.f32 %v498, %v734
        %v736 = vpop.f32.mrb[0].mxu0
        %v737 = vpop.f32.mrb[0].mxu0
        %v738 = vadd.f32 %v498, %v737
        %v739 = vpop.f32.mrb[0].mxu0
        %740 = vmatprep.mubr.bf16.mxu0 0
        %741 = vmatmul.mubr.bf16.gmra.mrb[0].mxu0 %v559
        %v742 = vpop.f32.mrb[0].mxu0
        %v743 = vadd.f32 %v498, %v742
        %v744 = vpop.f32.mrb[0].mxu0
        %v745 = vpop.f32.mrb[0].mxu0
        %v746 = vadd.f32 %v498, %v745
        %v747 = vpop.f32.mrb[0].mxu0
        %748 = vdwg.mxu0
        %v749 = vmax.f32 %v655, 0.0
        %v750 = vmax.f32 %v658, 0.0
        %v751 = vmax.f32 %v663, 0.0
        %v752 = vmax.f32 %v666, 0.0
        %v753 = vmax.f32 %v671, 0.0
        %v754 = vmax.f32 %v674, 0.0
        %v755 = vmax.f32 %v679, 0.0
        %v756 = vmax.f32 %v682, 0.0
        %v757 = vmax.f32 %v687, 0.0
        %v758 = vmax.f32 %v690, 0.0
        %v759 = vmax.f32 %v695, 0.0
        %v760 = vmax.f32 %v698, 0.0
        %v761 = vmax.f32 %v703, 0.0
        %v762 = vmax.f32 %v706, 0.0
        %v763 = vmax.f32 %v711, 0.0
        %v764 = vmax.f32 %v714, 0.0
        %v765 = vmax.f32 %v719, 0.0
        %v766 = vmax.f32 %v722, 0.0
        %v767 = vmax.f32 %v727, 0.0
        %v768 = vmax.f32 %v730, 0.0
        %v769 = vmax.f32 %v735, 0.0
        %v770 = vmax.f32 %v738, 0.0
        %v771 = vmax.f32 %v743, 0.0
        %v772 = vmax.f32 %v746, 0.0
        %v773 = vld [vmem:[#allocation2] sm:$0xff]
        %v774 = vld [vmem:[#allocation2 + $0x8] sm:$0xff]
        %v775 = vld [vmem:[#allocation2 + $0x10] sm:$0xff]
        %v776 = vld [vmem:[#allocation2 + $0x18] sm:$0xff]
        %v777 = vld [vmem:[#allocation2 + $0x20] sm:$0xff]
        %v778 = vld [vmem:[#allocation2 + $0x28] sm:$0xff]
        %v779 = vld [vmem:[#allocation2 + $0x30] sm:$0xff]
        %v780 = vld [vmem:[#allocation2 + $0x38] sm:$0xff]
        %v781 = vld [vmem:[#allocation2 + $0x40] sm:$0xff]
        %v782 = vld [vmem:[#allocation2 + $0x48] sm:$0xff]
        %v783 = vld [vmem:[#allocation2 + $0x50] sm:$0xff]
        %v784 = vld [vmem:[#allocation2 + $0x58] sm:$0xff]
        %v785 = vld [vmem:[#allocation2 + $0x60] sm:$0xff]
        %v786 = vld [vmem:[#allocation2 + $0x68] sm:$0xff]
        %v787 = vld [vmem:[#allocation2 + $0x70] sm:$0xff]
        %v788 = vld [vmem:[#allocation2 + $0x78] sm:$0xff]
        %v789 = vld [vmem:[#allocation2 + $0x80] sm:$0xff]
        %v790 = vld [vmem:[#allocation2 + $0x88] sm:$0xff]
        %v791 = vld [vmem:[#allocation2 + $0x90] sm:$0xff]
        %v792 = vld [vmem:[#allocation2 + $0x98] sm:$0xff]
        %v793 = vld [vmem:[#allocation2 + $0xa0] sm:$0xff]
        %v794 = vld [vmem:[#allocation2 + $0xa8] sm:$0xff]
        %v795 = vld [vmem:[#allocation2 + $0xb0] sm:$0xff]
        %v796 = vld [vmem:[#allocation2 + $0xb8] sm:$0xff]
        %v797 = vpack.c.bf16 %v750, %v749
        %v798 = vpack.c.bf16 %v752, %v751
        %v799 = vpack.c.bf16 %v754, %v753
        %v800 = vpack.c.bf16 %v756, %v755
        %v801 = vpack.c.bf16 %v758, %v757
        %v802 = vpack.c.bf16 %v760, %v759
        %v803 = vpack.c.bf16 %v762, %v761
        %v804 = vpack.c.bf16 %v764, %v763
        %v805 = vpack.c.bf16 %v766, %v765
        %v806 = vpack.c.bf16 %v768, %v767
        %v807 = vpack.c.bf16 %v770, %v769
        %v808 = vpack.c.bf16 %v772, %v771
        %v809 = vld [vmem:[%s368] sm:$0xf]
        %v810 = vld [vmem:[%s368 + $0x4] sm:$0xf]
        %v811 = vld [vmem:[%s368 + $0x8] sm:$0xf]
        %v812 = vld [vmem:[%s368 + $0xc] sm:$0xf]
        %v813 = vld [vmem:[%s368 + $0x10] sm:$0xf]
        %v814 = vld [vmem:[%s368 + $0x14] sm:$0xf]
        %v815 = vld [vmem:[%s368 + $0x18] sm:$0xf]
        %v816 = vld [vmem:[%s368 + $0x1c] sm:$0xf]
        %v817 = vld [vmem:[%s368 + $0x20] sm:$0xf]
        %v818 = vld [vmem:[%s368 + $0x24] sm:$0xf]
        %v819 = vld [vmem:[%s368 + $0x28] sm:$0xf]
        %v820 = vld [vmem:[%s368 + $0x2c] sm:$0xf]
        %v821 = vld [vmem:[%s368 + $0x30] sm:$0xf]
        %v822 = vld [vmem:[%s368 + $0x34] sm:$0xf]
        %v823 = vld [vmem:[%s368 + $0x38] sm:$0xf]
        %v824 = vld [vmem:[%s368 + $0x3c] sm:$0xf]
        %v841 = vunpack.c.l.b16 %v809
        %v842 = vunpack.c.l.b16 %v810
        %v843 = vunpack.c.l.b16 %v811
        %v844 = vunpack.c.l.b16 %v812
        %v845 = vunpack.c.l.b16 %v813
        %v846 = vunpack.c.l.b16 %v814
        %v847 = vunpack.c.l.b16 %v815
        %v848 = vunpack.c.l.b16 %v816
        %v849 = vunpack.c.l.b16 %v817
        %v850 = vunpack.c.l.b16 %v818
        %v851 = vunpack.c.l.b16 %v819
        %v852 = vunpack.c.l.b16 %v820
        %v853 = vunpack.c.l.b16 %v821
        %v854 = vunpack.c.l.b16 %v822
        %v855 = vunpack.c.l.b16 %v823
        %v856 = vunpack.c.l.b16 %v824
        %v857 = vpack.c.b16 %v842, %v841
        %v858 = vpack.c.b16 %v844, %v843
        %v859 = vpack.c.b16 %v846, %v845
        %v860 = vpack.c.b16 %v848, %v847
        %v861 = vpack.c.b16 %v850, %v849
        %v862 = vpack.c.b16 %v852, %v851
        %v863 = vpack.c.b16 %v854, %v853
        %v864 = vpack.c.b16 %v856, %v855
        %873 = vmatprep.subr.bf16.mxu0 0
        %874 = vmatpush1.bf16.msra.mxu0 %v857
        %875 = vmatprep.subr.bf16.mxu0 0
        %876 = vmatpush1.bf16.msra.mxu0 %v858
        %877 = vmatprep.subr.bf16.mxu0 0
        %878 = vmatpush1.bf16.msra.mxu0 %v859
        %879 = vmatprep.subr.bf16.mxu0 0
        %880 = vmatpush1.bf16.msra.mxu0 %v860
        %881 = vmatprep.subr.bf16.mxu0 0
        %882 = vmatpush1.bf16.msra.mxu0 %v861
        %883 = vmatprep.subr.bf16.mxu0 0
        %884 = vmatpush1.bf16.msra.mxu0 %v862
        %885 = vmatprep.subr.bf16.mxu0 0
        %886 = vmatpush1.bf16.msra.mxu0 %v863
        %887 = vmatprep.subr.bf16.mxu0 0
        %888 = vmatpush1.bf16.msra.mxu0 %v864
        %889 = vmatprep.subr.bf16.mxu0 0
        %890 = vmatpush1.bf16.msra.mxu0 0
        %891 = vmatprep.subr.bf16.mxu0 0
        %892 = vmatpush1.bf16.msra.mxu0 0
        %893 = vmatprep.subr.bf16.mxu0 0
        %894 = vmatpush1.bf16.msra.mxu0 0
        %895 = vmatprep.subr.bf16.mxu0 0
        %896 = vmatpush1.bf16.msra.mxu0 0
        %897 = vmatprep.subr.bf16.mxu0 0
        %898 = vmatpush1.bf16.msra.mxu0 0
        %899 = vmatprep.subr.bf16.mxu0 0
        %900 = vmatpush1.bf16.msra.mxu0 0
        %901 = vmatprep.subr.bf16.mxu0 0
        %902 = vmatpush1.bf16.msra.mxu0 0
        %903 = vmatprep.subr.bf16.mxu0 0
        %904 = vmatpush1.bf16.msra.mxu0 0
        %905 = vmatprep.mubr.bf16.mxu0 0
        %906 = vmatmul.mubr.bf16.gmra.mrb[0].mxu0 %v797
        %v907 = vpop.f32.mrb[0].mxu0
        %v908 = vadd.f32 0.0, %v907
        %v909 = vpop.f32.mrb[0].mxu0
        %v910 = vpop.f32.mrb[0].mxu0
        %v911 = vadd.f32 0.0, %v910
        %v912 = vpop.f32.mrb[0].mxu0
        %913 = vmatprep.mubr.bf16.mxu0 0
        %914 = vmatmul.mubr.bf16.gmra.mrb[0].mxu0 %v798
        %v915 = vpop.f32.mrb[0].mxu0
        %v916 = vadd.f32 0.0, %v915
        %v917 = vpop.f32.mrb[0].mxu0
        %v918 = vpop.f32.mrb[0].mxu0
        %v919 = vadd.f32 0.0, %v918
        %v920 = vpop.f32.mrb[0].mxu0
        %921 = vmatprep.mubr.bf16.mxu0 0
        %922 = vmatmul.mubr.bf16.gmra.mrb[0].mxu0 %v799
        %v923 = vpop.f32.mrb[0].mxu0
        %v924 = vadd.f32 0.0, %v923
        %v925 = vpop.f32.mrb[0].mxu0
        %v926 = vpop.f32.mrb[0].mxu0
        %v927 = vadd.f32 0.0, %v926
        %v928 = vpop.f32.mrb[0].mxu0
        %929 = vmatprep.mubr.bf16.mxu0 0
        %930 = vmatmul.mubr.bf16.gmra.mrb[0].mxu0 %v800
        %v931 = vpop.f32.mrb[0].mxu0
        %v932 = vadd.f32 0.0, %v931
        %v933 = vpop.f32.mrb[0].mxu0
        %v934 = vpop.f32.mrb[0].mxu0
        %v935 = vadd.f32 0.0, %v934
        %v936 = vpop.f32.mrb[0].mxu0
        %937 = vmatprep.mubr.bf16.mxu0 0
        %938 = vmatmul.mubr.bf16.gmra.mrb[0].mxu0 %v801
        %v939 = vpop.f32.mrb[0].mxu0
        %v940 = vadd.f32 0.0, %v939
        %v941 = vpop.f32.mrb[0].mxu0
        %v942 = vpop.f32.mrb[0].mxu0
        %v943 = vadd.f32 0.0, %v942
        %v944 = vpop.f32.mrb[0].mxu0
        %945 = vmatprep.mubr.bf16.mxu0 0
        %946 = vmatmul.mubr.bf16.gmra.mrb[0].mxu0 %v802
        %v947 = vpop.f32.mrb[0].mxu0
        %v948 = vadd.f32 0.0, %v947
        %v949 = vpop.f32.mrb[0].mxu0
        %v950 = vpop.f32.mrb[0].mxu0
        %v951 = vadd.f32 0.0, %v950
        %v952 = vpop.f32.mrb[0].mxu0
        %953 = vmatprep.mubr.bf16.mxu0 0
        %954 = vmatmul.mubr.bf16.gmra.mrb[0].mxu0 %v803
        %v955 = vpop.f32.mrb[0].mxu0
        %v956 = vadd.f32 0.0, %v955
        %v957 = vpop.f32.mrb[0].mxu0
        %v958 = vpop.f32.mrb[0].mxu0
        %v959 = vadd.f32 0.0, %v958
        %v960 = vpop.f32.mrb[0].mxu0
        %961 = vmatprep.mubr.bf16.mxu0 0
        %962 = vmatmul.mubr.bf16.gmra.mrb[0].mxu0 %v804
        %v963 = vpop.f32.mrb[0].mxu0
        %v964 = vadd.f32 0.0, %v963
        %v965 = vpop.f32.mrb[0].mxu0
        %v966 = vpop.f32.mrb[0].mxu0
        %v967 = vadd.f32 0.0, %v966
        %v968 = vpop.f32.mrb[0].mxu0
        %969 = vmatprep.mubr.bf16.mxu0 0
        %970 = vmatmul.mubr.bf16.gmra.mrb[0].mxu0 %v805
        %v971 = vpop.f32.mrb[0].mxu0
        %v972 = vadd.f32 0.0, %v971
        %v973 = vpop.f32.mrb[0].mxu0
        %v974 = vpop.f32.mrb[0].mxu0
        %v975 = vadd.f32 0.0, %v974
        %v976 = vpop.f32.mrb[0].mxu0
        %977 = vmatprep.mubr.bf16.mxu0 0
        %978 = vmatmul.mubr.bf16.gmra.mrb[0].mxu0 %v806
        %v979 = vpop.f32.mrb[0].mxu0
        %v980 = vadd.f32 0.0, %v979
        %v981 = vpop.f32.mrb[0].mxu0
        %v982 = vpop.f32.mrb[0].mxu0
        %v983 = vadd.f32 0.0, %v982
        %v984 = vpop.f32.mrb[0].mxu0
        %985 = vmatprep.mubr.bf16.mxu0 0
        %986 = vmatmul.mubr.bf16.gmra.mrb[0].mxu0 %v807
        %v987 = vpop.f32.mrb[0].mxu0
        %v988 = vadd.f32 0.0, %v987
        %v989 = vpop.f32.mrb[0].mxu0
        %v990 = vpop.f32.mrb[0].mxu0
        %v991 = vadd.f32 0.0, %v990
        %v992 = vpop.f32.mrb[0].mxu0
        %993 = vmatprep.mubr.bf16.mxu0 0
        %994 = vmatmul.mubr.bf16.gmra.mrb[0].mxu0 %v808
        %v995 = vpop.f32.mrb[0].mxu0
        %v996 = vadd.f32 0.0, %v995
        %v997 = vpop.f32.mrb[0].mxu0
        %v998 = vpop.f32.mrb[0].mxu0
        %v999 = vadd.f32 0.0, %v998
        %v1000 = vpop.f32.mrb[0].mxu0
        %1001 = vdwg.mxu0
        %v1002 = vadd.f32 %v773, %v908
        %v1003 = vadd.f32 %v774, %v911
        %v1004 = vadd.f32 %v775, %v916
        %v1005 = vadd.f32 %v776, %v919
        %v1006 = vadd.f32 %v777, %v924
        %v1007 = vadd.f32 %v778, %v927
        %v1008 = vadd.f32 %v779, %v932
        %v1009 = vadd.f32 %v780, %v935
        %v1010 = vadd.f32 %v781, %v940
        %v1011 = vadd.f32 %v782, %v943
        %v1012 = vadd.f32 %v783, %v948
        %v1013 = vadd.f32 %v784, %v951
        %v1014 = vadd.f32 %v785, %v956
        %v1015 = vadd.f32 %v786, %v959
        %v1016 = vadd.f32 %v787, %v964
        %v1017 = vadd.f32 %v788, %v967
        %v1018 = vadd.f32 %v789, %v972
        %v1019 = vadd.f32 %v790, %v975
        %v1020 = vadd.f32 %v791, %v980
        %v1021 = vadd.f32 %v792, %v983
        %v1022 = vadd.f32 %v793, %v988
        %v1023 = vadd.f32 %v794, %v991
        %v1024 = vadd.f32 %v795, %v996
        %v1025 = vadd.f32 %v796, %v999
        %1026 = vst [vmem:[#allocation2] sm:$0xff] %v1002
        %1027 = vst [vmem:[#allocation2 + $0x8] sm:$0xff] %v1003
        %1028 = vst [vmem:[#allocation2 + $0x10] sm:$0xff] %v1004
        %1029 = vst [vmem:[#allocation2 + $0x18] sm:$0xff] %v1005
        %1030 = vst [vmem:[#allocation2 + $0x20] sm:$0xff] %v1006
        %1031 = vst [vmem:[#allocation2 + $0x28] sm:$0xff] %v1007
        %1032 = vst [vmem:[#allocation2 + $0x30] sm:$0xff] %v1008
        %1033 = vst [vmem:[#allocation2 + $0x38] sm:$0xff] %v1009
        %1034 = vst [vmem:[#allocation2 + $0x40] sm:$0xff] %v1010
        %1035 = vst [vmem:[#allocation2 + $0x48] sm:$0xff] %v1011
        %1036 = vst [vmem:[#allocation2 + $0x50] sm:$0xff] %v1012
        %1037 = vst [vmem:[#allocation2 + $0x58] sm:$0xff] %v1013
        %1038 = vst [vmem:[#allocation2 + $0x60] sm:$0xff] %v1014
        %1039 = vst [vmem:[#allocation2 + $0x68] sm:$0xff] %v1015
        %1040 = vst [vmem:[#allocation2 + $0x70] sm:$0xff] %v1016
        %1041 = vst [vmem:[#allocation2 + $0x78] sm:$0xff] %v1017
        %1042 = vst [vmem:[#allocation2 + $0x80] sm:$0xff] %v1018
        %1043 = vst [vmem:[#allocation2 + $0x88] sm:$0xff] %v1019
        %1044 = vst [vmem:[#allocation2 + $0x90] sm:$0xff] %v1020
        %1045 = vst [vmem:[#allocation2 + $0x98] sm:$0xff] %v1021
        %1046 = vst [vmem:[#allocation2 + $0xa0] sm:$0xff] %v1022
        %1047 = vst [vmem:[#allocation2 + $0xa8] sm:$0xff] %v1023
        %1048 = vst [vmem:[#allocation2 + $0xb0] sm:$0xff] %v1024
        %1049 = vst [vmem:[#allocation2 + $0xb8] sm:$0xff] %v1025
        %p1050 = scmp.eq.s32.totalorder %s35, 1
        // Predicated region
        $region65: #{tpu_custom_call.1} parent=39 // pred_check
          %p1051 = pneg %p1050
        $region66: #{tpu_custom_call.1} parent=39 // pred_check_branch
          %1053 = sbr.rel (%p1051) target = $region68
        $region67: #{tpu_custom_call.1} parent=39 // pred_region
          %v1054 = vld [vmem:[#allocation2] sm:$0xff]
          %v1055 = vld [vmem:[#allocation2 + $0x8] sm:$0xff]
          %v1056 = vld [vmem:[#allocation2 + $0x10] sm:$0xff]
          %v1057 = vld [vmem:[#allocation2 + $0x18] sm:$0xff]
          %v1058 = vld [vmem:[#allocation2 + $0x20] sm:$0xff]
          %v1059 = vld [vmem:[#allocation2 + $0x28] sm:$0xff]
          %v1060 = vld [vmem:[#allocation2 + $0x30] sm:$0xff]
          %v1061 = vld [vmem:[#allocation2 + $0x38] sm:$0xff]
          %v1062 = vld [vmem:[#allocation2 + $0x40] sm:$0xff]
          %v1063 = vld [vmem:[#allocation2 + $0x48] sm:$0xff]
          %v1064 = vld [vmem:[#allocation2 + $0x50] sm:$0xff]
          %v1065 = vld [vmem:[#allocation2 + $0x58] sm:$0xff]
          %v1066 = vld [vmem:[#allocation2 + $0x60] sm:$0xff]
          %v1067 = vld [vmem:[#allocation2 + $0x68] sm:$0xff]
          %v1068 = vld [vmem:[#allocation2 + $0x70] sm:$0xff]
          %v1069 = vld [vmem:[#allocation2 + $0x78] sm:$0xff]
          %v1070 = vld [vmem:[#allocation2 + $0x80] sm:$0xff]
          %v1071 = vld [vmem:[#allocation2 + $0x88] sm:$0xff]
          %v1072 = vld [vmem:[#allocation2 + $0x90] sm:$0xff]
          %v1073 = vld [vmem:[#allocation2 + $0x98] sm:$0xff]
          %v1074 = vld [vmem:[#allocation2 + $0xa0] sm:$0xff]
          %v1075 = vld [vmem:[#allocation2 + $0xa8] sm:$0xff]
          %v1076 = vld [vmem:[#allocation2 + $0xb0] sm:$0xff]
          %v1077 = vld [vmem:[#allocation2 + $0xb8] sm:$0xff]
          %v1078 = vld [vmem:[%s376] sm:$0x1]
          %v1080 = vlaneseq
          %v1081 = vshrl.u32 %v1080, 7
          %v1082 = vsub.s32 0, %v1081
          %v1083 = vrot.slane %v1078, %v1082
          %v1085 = vadd.f32 %v1054, %v1083
          %v1086 = vadd.f32 %v1055, %v1083
          %v1087 = vadd.f32 %v1056, %v1083
          %v1088 = vadd.f32 %v1057, %v1083
          %v1089 = vadd.f32 %v1058, %v1083
          %v1090 = vadd.f32 %v1059, %v1083
          %v1091 = vadd.f32 %v1060, %v1083
          %v1092 = vadd.f32 %v1061, %v1083
          %v1093 = vadd.f32 %v1062, %v1083
          %v1094 = vadd.f32 %v1063, %v1083
          %v1095 = vadd.f32 %v1064, %v1083
          %v1096 = vadd.f32 %v1065, %v1083
          %v1097 = vadd.f32 %v1066, %v1083
          %v1098 = vadd.f32 %v1067, %v1083
          %v1099 = vadd.f32 %v1068, %v1083
          %v1100 = vadd.f32 %v1069, %v1083
          %v1101 = vadd.f32 %v1070, %v1083
          %v1102 = vadd.f32 %v1071, %v1083
          %v1103 = vadd.f32 %v1072, %v1083
          %v1104 = vadd.f32 %v1073, %v1083
          %v1105 = vadd.f32 %v1074, %v1083
          %v1106 = vadd.f32 %v1075, %v1083
          %v1107 = vadd.f32 %v1076, %v1083
          %v1108 = vadd.f32 %v1077, %v1083
          %1109 = vst [vmem:[%s420] sm:$0xff] %v1085
          %1110 = vst [vmem:[%s420 + $0x8] sm:$0xff] %v1086
          %1111 = vst [vmem:[%s420 + $0x10] sm:$0xff] %v1087
          %1112 = vst [vmem:[%s420 + $0x18] sm:$0xff] %v1088
          %1113 = vst [vmem:[%s420 + $0x20] sm:$0xff] %v1089
          %1114 = vst [vmem:[%s420 + $0x28] sm:$0xff] %v1090
          %1115 = vst [vmem:[%s420 + $0x30] sm:$0xff] %v1091
          %1116 = vst [vmem:[%s420 + $0x38] sm:$0xff] %v1092
          %1117 = vst [vmem:[%s420 + $0x40] sm:$0xff] %v1093
          %1118 = vst [vmem:[%s420 + $0x48] sm:$0xff] %v1094
          %1119 = vst [vmem:[%s420 + $0x50] sm:$0xff] %v1095
          %1120 = vst [vmem:[%s420 + $0x58] sm:$0xff] %v1096
          %1121 = vst [vmem:[%s420 + $0x60] sm:$0xff] %v1097
          %1122 = vst [vmem:[%s420 + $0x68] sm:$0xff] %v1098
          %1123 = vst [vmem:[%s420 + $0x70] sm:$0xff] %v1099
          %1124 = vst [vmem:[%s420 + $0x78] sm:$0xff] %v1100
          %1125 = vst [vmem:[%s420 + $0x80] sm:$0xff] %v1101
          %1126 = vst [vmem:[%s420 + $0x88] sm:$0xff] %v1102
          %1127 = vst [vmem:[%s420 + $0x90] sm:$0xff] %v1103
          %1128 = vst [vmem:[%s420 + $0x98] sm:$0xff] %v1104
          %1129 = vst [vmem:[%s420 + $0xa0] sm:$0xff] %v1105
          %1130 = vst [vmem:[%s420 + $0xa8] sm:$0xff] %v1106
          %1131 = vst [vmem:[%s420 + $0xb0] sm:$0xff] %v1107
          %1132 = vst [vmem:[%s420 + $0xb8] sm:$0xff] %v1108
        $region68: #{tpu_custom_call.1} parent=39 // pred_fallthru
          _
        %s1133 = sand.u32 %s195, 1
        %s1134 = scalar_lea.sflag [#allocation5], %s1133
        %s1135 = sand.u32 %s195, 1
        %s1136 = smul.addr %s1135, 192
        %s1137 = scalar_lea.vmem [#allocation12], %s1136
        // Predicated region
        $region69: #{tpu_custom_call.1} parent=39 // pred_check
          %p1138 = pneg %p205
        $region70: #{tpu_custom_call.1} parent=39 // pred_check_branch
          %1140 = sbr.rel (%p1138) target = $region72
        $region71: #{tpu_custom_call.1} parent=39 // pred_region
          %s1141 = smul.u32 24, %s34
          %s1143 = ssub.s32 3072, 3072
          %1144 = vsyncadd %s1134, %s1143
          %s1145 = smul.addr %s33, 24
          %s1146 = sadd.s32 %s1141, %s1145
          %s1147 = smul.addr %s1146, 128
          %s1148 = scalar_lea.hbm %s5, %s1147
          %s1149 = sshll.u32 %s1137, 4
          %s1150 = int_to_ptr.vmem [resolvable:$true] %s1149
          %1155 = dma.vmem_to_hbm [thread:$0]  %s1150, 3072, %s1148, %s1134, 128, 128, 8
        $region72: #{tpu_custom_call.1} parent=39 // pred_fallthru
          _
      $region40: #{tpu_custom_call.1} parent=5 // pred_fallthru
        _
      %p1156 = scmp.le.s32.totalorder 2, %s23
      // Predicated region
      $region73: #{tpu_custom_call.1} parent=5 // pred_check
        %p1157 = pneg %p1156
      $region74: #{tpu_custom_call.1} parent=5 // pred_check_branch
        %1159 = sbr.rel (%p1157) target = $region76
      $region75: #{tpu_custom_call.1} parent=5 // pred_region
        %s1160 = ssub.s32 %s23, 2
        // Predicated region
        $region77: #{tpu_custom_call.1} parent=75 // pred_check
          %p1161 = pneg %p211
        $region78: #{tpu_custom_call.1} parent=75 // pred_check_branch
          %1163 = sbr.rel (%p1161) target = $region80
        $region79: #{tpu_custom_call.1} parent=75 // pred_region
          %s1164 = sand.u32 %s196, 1
          %s1165 = scalar_lea.sflag [#allocation5], %s1164
          %s1166 = sand.u32 %s196, 1
          %s1167 = smul.addr %s1166, 192
          %s1168 = scalar_lea.vmem [#allocation12], %s1167
          %1169 = dma.done %s1165, 3072
        $region80: #{tpu_custom_call.1} parent=75 // pred_fallthru
          _
      $region76: #{tpu_custom_call.1} parent=5 // pred_fallthru
        _
    $region6: #{tpu_custom_call.1} parent=1 // loop_footer
      %s27 = sadd.s32 1, %s23
    $region7: #{tpu_custom_call.1} parent=1 // loop_footer_branch
      %22 = sbr.rel target = $region3
    $region8: #{tpu_custom_call.1} parent=1 // loop_exit
      _
    %1170 = vsyncpa [#allocation4], 1
    %s1171 = scalar_lea.sflag [#allocation4], 1
    %1172 = vsyncpa %s1171, 1
    %1173 = vsyncpa [#allocation7], 1
    %s1174 = scalar_lea.sflag [#allocation7], 1
    %1175 = vsyncpa %s1174, 1
    %1176 = vsyncpa [#allocation10], 1
    %s1177 = scalar_lea.sflag [#allocation10], 1
    %1178 = vsyncpa %s1177, 1
    %1179 = vsyncpa [#allocation5], 1
    %s1180 = scalar_lea.sflag [#allocation5], 1
    %1181 = vsyncpa %s1180, 1

</llo_original>
